<compile_context>
chip_gen: v6e
topology: v6e:2x2x1
jax: 0.10.0
libtpu: 0.0.40
codegen_flags: <defaults>
</compile_context>

<pallas_src>
import functools

import jax
import jax.numpy as jnp
from jax.experimental import pallas as pl
from jax.experimental.pallas import tpu as pltpu


def _round_up(x, m):
    return ((x + m - 1) // m) * m


def _cdiv(a, b):
    return -(-a // b)


# ---------------------------------------------------------------------------
# Fused kernel
# ---------------------------------------------------------------------------
def _combined_mlp_kernel(*refs, layer_counts):
    """Fused CombinedMLP forward for one batch tile.

    refs = ( x_0 .. x_{n-1},                         # (TILE_B, in_i) VMEM, native dtype
             wt_00..wt_0{L0-1}, b_00..b_0{L0-1},     # sub-MLP 0 params (pre-transposed /
             ...                                     #  head-folded), VMEM-resident
             o_ref )                                 # (TILE_B, 1) VMEM f32
    """
    n_mlps = len(layer_counts)
    x_refs = refs[:n_mlps]
    idx = n_mlps
    mlp_refs = []
    for L in layer_counts:
        ws = refs[idx: idx + L]
        bs = refs[idx + L: idx + 2 * L]
        idx += 2 * L
        mlp_refs.append((ws, bs))
    o_ref = refs[idx]

    acc = None
    for i, (ws, bs) in enumerate(mlp_refs):
        # x.float() happens here, after the (narrow) DMA, not in the wrapper.
        h = x_refs[i][...].astype(jnp.float32)                # (TILE_B, in_i)
        L = layer_counts[i]
        for l in range(L):
            w = ws[l][...]                                    # (in_l, out_l) pre-transposed
            b = bs[l][...]                                    # (1, out_l)
            h = jnp.dot(h, w, preferred_element_type=jnp.float32) + b
            if l < L - 1:                                     # ReLU between layers only
                h = jnp.maximum(h, 0.0)
        # h is (TILE_B, 1); fc_w[0, i] and fc_b are already folded into the
        # final layer's weight/bias, so concat + Linear(n_mlps, 1) is a plain sum.
        acc = h if acc is None else acc + h

    # Exact f32 sigmoid (keeps 1e-5 parity with the reference).
    o_ref[...] = 1.0 / (1.0 + jnp.exp(-acc))


# ---------------------------------------------------------------------------
# VMEM budgeting / tile choice
# ---------------------------------------------------------------------------
_VMEM_BUDGET_BYTES = 20 * 1024 * 1024     # conservative: v7x scoped default is 32 MiB


def _padded_bytes_2d(shape, itemsize):
    r = _round_up(max(int(shape[0]), 1), 8)
    c = _round_up(max(int(shape[1]), 1), 128)
    return r * c * int(itemsize)


def _vmem_need_bytes(xs, param_args, tile_b):
    need = 0
    for x in xs:                                   # double-buffered input tiles
        need += 2 * _padded_bytes_2d((tile_b, x.shape[1]), jnp.dtype(x.dtype).itemsize)
    for p in param_args:                           # weights/biases (pipelined buffers)
        need += 2 * _padded_bytes_2d(p.shape, 4)
    need += 2 * _padded_bytes_2d((tile_b, 1), 4)   # output tile
    return need


def _choose_tile_b(B, cap, xs, param_args):
    if B <= 16:
        tile = B                                   # single exact block (== full array)
    elif B <= 2 * cap:
        # aim for >= 2 grid steps so v7x's two TensorCores both get work
        tile = min(cap, _round_up(_cdiv(B, 2), 8))
    else:
        tile = cap
    # shrink if the explicit VMEM budget would be blown (matters on v7x: 64 MiB)
    while tile > 256 and _vmem_need_bytes(xs, param_args, tile) > _VMEM_BUDGET_BYTES:
        tile = _round_up(tile // 2, 8)
    return tile


# ---------------------------------------------------------------------------
# Wrapper
# ---------------------------------------------------------------------------
def combined_mlp_forward(xs, mlp_params, fc_w, fc_b, *, tile_b_max=1024):
    """CombinedMLP.forward.

    xs:          list of (B, in_i) arrays (any float dtype; cast to f32 in-kernel).
    mlp_params:  list of (weights, biases) per sub-MLP;
                 weights[l]: (out_l, in_l) (PyTorch nn.Linear layout), biases[l]: (out_l,).
    fc_w: (1, n_mlps), fc_b: (1,).  Returns (B, 1) float32.
    """
    n_mlps = len(xs)
    assert len(mlp_params) == n_mlps
    B = xs[0].shape[0]

    layer_counts = tuple(len(ws) for ws, _ in mlp_params)
    fc_w_flat = jnp.asarray(fc_w, jnp.float32).reshape(-1)      # (n_mlps,)
    fc_b_val = jnp.asarray(fc_b, jnp.float32).reshape(())       # scalar

    # Pre-transpose the (tiny) weights and fold the head (fc_w scale + fc_b shift)
    # into each sub-MLP's final layer.  This is a few hundred floats of one-time
    # wrapper work; it removes all SMEM scalar reads and broadcasts from the kernel.
    param_args, param_specs = [], []
    for i, (ws, bs) in enumerate(mlp_params):
        assert ws[-1].shape[0] == 1, "each sub-MLP must end with out_features == 1"
        L = len(ws)
        for l, w in enumerate(ws):
            w32 = jnp.asarray(w, jnp.float32)                   # (out, in)
            if l == L - 1:
                w32 = w32 * fc_w_flat[i]
            wt = w32.T                                          # (in, out)
            param_args.append(wt)
            param_specs.append(pl.BlockSpec(wt.shape, lambda g: (0, 0)))  # VMEM-resident
        for l, b in enumerate(bs):
            b32 = jnp.asarray(b, jnp.float32).reshape(1, -1)    # (1, out)
            if l == L - 1:
                b32 = b32 * fc_w_flat[i]
                if i == 0:
                    b32 = b32 + fc_b_val                        # add fc_b exactly once
            param_args.append(b32)
            param_specs.append(pl.BlockSpec(b32.shape, lambda g: (0, 0)))

    tile_b = _choose_tile_b(B, tile_b_max, xs, param_args)
    grid = (_cdiv(B, tile_b),)

    # Inputs stay in HBM natural layout & native dtype; blocks ride the batch axis.
    x_specs = [pl.BlockSpec((tile_b, x.shape[1]), lambda g: (g, 0)) for x in xs]
    out_spec = pl.BlockSpec((tile_b, 1), lambda g: (g, 0))

    # Only raise the scoped-VMEM limit if the budget actually needs it.
    need = _vmem_need_bytes(xs, param_args, tile_b)
    vmem_limit = None
    if need > 14 * 1024 * 1024:
        vmem_limit = int(min(need + need // 4 + (2 << 20), 48 * 1024 * 1024))

    # Advisory cost estimate so XLA can schedule around this latency-bound call.
    flops = 0
    bytes_accessed = 4 * B                                       # output
    for x in xs:
        bytes_accessed += int(x.size) * jnp.dtype(x.dtype).itemsize
    for ws, _ in mlp_params:
        for w in ws:
            flops += 2 * B * int(w.shape[0]) * int(w.shape[1])
            bytes_accessed += 4 * (int(w.size) + int(w.shape[0]))
    flops += 4 * B                                               # sum + sigmoid epilogue

    kernel = functools.partial(_combined_mlp_kernel, layer_counts=layer_counts)
    out = pl.pallas_call(
        kernel,
        out_shape=jax.ShapeDtypeStruct((B, 1), jnp.float32),
        grid=grid,
        in_specs=x_specs + param_specs,
        out_specs=out_spec,
        compiler_params=pltpu.CompilerParams(
            dimension_semantics=("parallel",),
            vmem_limit_bytes=vmem_limit),
        cost_estimate=pl.CostEstimate(
            flops=flops, transcendentals=B, bytes_accessed=bytes_accessed),
    )(*xs, *param_args)

    return out


# ---------------------------------------------------------------------------
# Deterministic parameter init (PyTorch nn.Linear-style uniform bounds)
# ---------------------------------------------------------------------------
def init_linear(key, in_f, out_f):
    kw, kb = jax.random.split(key)
    bound = 1.0 / jnp.sqrt(float(in_f))
    w = jax.random.uniform(kw, (out_f, in_f), jnp.float32, -bound, bound)
    b = jax.random.uniform(kb, (out_f,), jnp.float32, -bound, bound)
    return w, b


def init_mlp(key, struct):
    ws, bs = [], []
    for prev, cur in zip(struct[:-1], struct[1:]):
        key, sub = jax.random.split(key)
        w, b = init_linear(sub, prev, cur)
        ws.append(w)
        bs.append(b)
    return ws, bs


# ---------------------------------------------------------------------------
# Pure-JAX reference (matches the PyTorch module semantics)
# ---------------------------------------------------------------------------
def reference_forward(xs, mlp_params, fc_w, fc_b):
    partials = []
    for x, (ws, bs) in zip(xs, mlp_params):
        h = jnp.asarray(x, jnp.float32)
        for i, (w, b) in enumerate(zip(ws, bs)):
            h = h @ w.T + b.reshape(1, -1)
            if i < len(ws) - 1:
                h = jnp.maximum(h, 0.0)
        partials.append(h)
    c = jnp.concatenate(partials, axis=1)
    y = c @ fc_w.reshape(1, -1).T + fc_b.reshape(1, 1)
    return 1.0 / (1.0 + jnp.exp(-y))


# ---------------------------------------------------------------------------
if __name__ == "__main__":
    key = jax.random.PRNGKey(0)

    structs = [[16, 32, 1], [8, 32, 1]]   # each sub-MLP ends in 1 -> concat dim == n_mlps
    n_mlps = len(structs)

    # sub-MLP params
    mlp_params = []
    for s in structs:
        key, sub = jax.random.split(key)
        mlp_params.append(init_mlp(sub, s))

    # final fc: Linear(n_mlps, 1)
    key, kfc = jax.random.split(key)
    fc_w, fc_b = init_linear(kfc, n_mlps, 1)

    ok = True
    # Two batch sizes: a tiny one (single exact block) and a moderate one that
    # exercises a 2-step "parallel" grid (v7x two-TC sharding path).
    for B in (2, 192):
        key, k0, k1 = jax.random.split(key, 3)
        xs = [
            jax.random.normal(k0, (B, structs[0][0]), jnp.float32),
            jax.random.normal(k1, (B, structs[1][0]), jnp.float32),
        ]
        out = combined_mlp_forward(xs, mlp_params, fc_w, fc_b)
        out = jax.block_until_ready(out)
        ref = reference_forward(xs, mlp_params, fc_w, fc_b)
        assert out.shape == (B, 1), out.shape
        ok = ok and bool(jnp.allclose(out, ref, atol=1e-5, rtol=1e-5))

    assert ok
    print("KERNEL_OK")
</pallas_src>

<mosaic_0001>
module attributes {stable_mosaic.version = 11 : i64} {
  func.func @_combined_mlp_kernel(%arg0: i32, %arg1: memref<2x16xf32, #tpu.memory_space<vmem>>, %arg2: memref<2x8xf32, #tpu.memory_space<vmem>>, %arg3: memref<16x32xf32, #tpu.memory_space<vmem>>, %arg4: memref<32x1xf32, #tpu.memory_space<vmem>>, %arg5: memref<1x32xf32, #tpu.memory_space<vmem>>, %arg6: memref<1x1xf32, #tpu.memory_space<vmem>>, %arg7: memref<8x32xf32, #tpu.memory_space<vmem>>, %arg8: memref<32x1xf32, #tpu.memory_space<vmem>>, %arg9: memref<1x32xf32, #tpu.memory_space<vmem>>, %arg10: memref<1x1xf32, #tpu.memory_space<vmem>>, %arg11: memref<2x1xf32, #tpu.memory_space<vmem>>) attributes {dimension_semantics = [#tpu.dimension_semantics<parallel>], iteration_bounds = array<i64: 1>, scalar_prefetch = 0 : i64, scratch_operands = 0 : i64, tpu.core_type = #tpu.core_type<tc>, window_params = [{transform_indices = @transform_0, window_bounds = array<i64: 2, 16>}, {transform_indices = @transform_1, window_bounds = array<i64: 2, 8>}, {pipeline_mode = #tpu.pipeline_mode<synchronous>, transform_indices = @transform_2, window_bounds = array<i64: 16, 32>}, {pipeline_mode = #tpu.pipeline_mode<synchronous>, transform_indices = @transform_3, window_bounds = array<i64: 32, 1>}, {pipeline_mode = #tpu.pipeline_mode<synchronous>, transform_indices = @transform_4, window_bounds = array<i64: 1, 32>}, {pipeline_mode = #tpu.pipeline_mode<synchronous>, transform_indices = @transform_5, window_bounds = array<i64: 1, 1>}, {pipeline_mode = #tpu.pipeline_mode<synchronous>, transform_indices = @transform_6, window_bounds = array<i64: 8, 32>}, {pipeline_mode = #tpu.pipeline_mode<synchronous>, transform_indices = @transform_7, window_bounds = array<i64: 32, 1>}, {pipeline_mode = #tpu.pipeline_mode<synchronous>, transform_indices = @transform_8, window_bounds = array<i64: 1, 32>}, {pipeline_mode = #tpu.pipeline_mode<synchronous>, transform_indices = @transform_9, window_bounds = array<i64: 1, 1>}, {transform_indices = @transform_10, window_bounds = array<i64: 2, 1>}]} {
    %c0 = arith.constant 0 : index
    %c0_0 = arith.constant 0 : index
    %0 = vector.load %arg1[%c0, %c0_0] : memref<2x16xf32, #tpu.memory_space<vmem>>, vector<2x16xf32>
    %c0_1 = arith.constant 0 : index
    %c0_2 = arith.constant 0 : index
    %1 = vector.load %arg3[%c0_1, %c0_2] : memref<16x32xf32, #tpu.memory_space<vmem>>, vector<16x32xf32>
    %c0_3 = arith.constant 0 : index
    %c0_4 = arith.constant 0 : index
    %2 = vector.load %arg5[%c0_3, %c0_4] : memref<1x32xf32, #tpu.memory_space<vmem>>, vector<1x32xf32>
    %cst = arith.constant dense<0.000000e+00> : vector<2x32xf32>
    %3 = tpu.matmul %0, %1, %cst {dimension_numbers = #tpu.dot_dimension_numbers<[1], [0], [0], [1], [0, 0, 1, 1], [], []>} : vector<2x16xf32>, vector<16x32xf32>, vector<2x32xf32> -> vector<2x32xf32>
    %4 = vector.broadcast %2 : vector<1x32xf32> to vector<2x32xf32>
    %5 = arith.addf %3, %4 : vector<2x32xf32>
    %cst_5 = arith.constant 0.000000e+00 : f32
    %6 = vector.broadcast %cst_5 : f32 to vector<2x32xf32>
    %7 = arith.maximumf %5, %6 : vector<2x32xf32>
    %c0_6 = arith.constant 0 : index
    %c0_7 = arith.constant 0 : index
    %8 = vector.load %arg4[%c0_6, %c0_7] : memref<32x1xf32, #tpu.memory_space<vmem>>, vector<32x1xf32>
    %c0_8 = arith.constant 0 : index
    %c0_9 = arith.constant 0 : index
    %9 = vector.load %arg6[%c0_8, %c0_9] : memref<1x1xf32, #tpu.memory_space<vmem>>, vector<1x1xf32>
    %cst_10 = arith.constant dense<0.000000e+00> : vector<2x1xf32>
    %10 = tpu.matmul %7, %8, %cst_10 {dimension_numbers = #tpu.dot_dimension_numbers<[1], [0], [0], [1], [0, 0, 1, 1], [], []>} : vector<2x32xf32>, vector<32x1xf32>, vector<2x1xf32> -> vector<2x1xf32>
    %11 = vector.broadcast %9 : vector<1x1xf32> to vector<2x1xf32>
    %12 = arith.addf %10, %11 : vector<2x1xf32>
    %c0_11 = arith.constant 0 : index
    %c0_12 = arith.constant 0 : index
    %13 = vector.load %arg2[%c0_11, %c0_12] : memref<2x8xf32, #tpu.memory_space<vmem>>, vector<2x8xf32>
    %c0_13 = arith.constant 0 : index
    %c0_14 = arith.constant 0 : index
    %14 = vector.load %arg7[%c0_13, %c0_14] : memref<8x32xf32, #tpu.memory_space<vmem>>, vector<8x32xf32>
    %c0_15 = arith.constant 0 : index
    %c0_16 = arith.constant 0 : index
    %15 = vector.load %arg9[%c0_15, %c0_16] : memref<1x32xf32, #tpu.memory_space<vmem>>, vector<1x32xf32>
    %cst_17 = arith.constant dense<0.000000e+00> : vector<2x32xf32>
    %16 = tpu.matmul %13, %14, %cst_17 {dimension_numbers = #tpu.dot_dimension_numbers<[1], [0], [0], [1], [0, 0, 1, 1], [], []>} : vector<2x8xf32>, vector<8x32xf32>, vector<2x32xf32> -> vector<2x32xf32>
    %17 = vector.broadcast %15 : vector<1x32xf32> to vector<2x32xf32>
    %18 = arith.addf %16, %17 : vector<2x32xf32>
    %cst_18 = arith.constant 0.000000e+00 : f32
    %19 = vector.broadcast %cst_18 : f32 to vector<2x32xf32>
    %20 = arith.maximumf %18, %19 : vector<2x32xf32>
    %c0_19 = arith.constant 0 : index
    %c0_20 = arith.constant 0 : index
    %21 = vector.load %arg8[%c0_19, %c0_20] : memref<32x1xf32, #tpu.memory_space<vmem>>, vector<32x1xf32>
    %c0_21 = arith.constant 0 : index
    %c0_22 = arith.constant 0 : index
    %22 = vector.load %arg10[%c0_21, %c0_22] : memref<1x1xf32, #tpu.memory_space<vmem>>, vector<1x1xf32>
    %cst_23 = arith.constant dense<0.000000e+00> : vector<2x1xf32>
    %23 = tpu.matmul %20, %21, %cst_23 {dimension_numbers = #tpu.dot_dimension_numbers<[1], [0], [0], [1], [0, 0, 1, 1], [], []>} : vector<2x32xf32>, vector<32x1xf32>, vector<2x1xf32> -> vector<2x1xf32>
    %24 = vector.broadcast %22 : vector<1x1xf32> to vector<2x1xf32>
    %25 = arith.addf %23, %24 : vector<2x1xf32>
    %26 = arith.addf %12, %25 : vector<2x1xf32>
    %cst_24 = arith.constant 0.000000e+00 : f32
    %27 = vector.broadcast %cst_24 : f32 to vector<2x1xf32>
    %28 = arith.subf %27, %26 : vector<2x1xf32>
    %29 = math.exp %28 : vector<2x1xf32>
    %cst_25 = arith.constant 1.000000e+00 : f32
    %30 = vector.broadcast %cst_25 : f32 to vector<2x1xf32>
    %31 = arith.addf %30, %29 : vector<2x1xf32>
    %cst_26 = arith.constant 1.000000e+00 : f32
    %32 = vector.broadcast %cst_26 : f32 to vector<2x1xf32>
    %33 = arith.divf %32, %31 : vector<2x1xf32>
    %c0_27 = arith.constant 0 : index
    %c0_28 = arith.constant 0 : index
    %34 = vector.load %arg11[%c0_27, %c0_28] : memref<2x1xf32, #tpu.memory_space<vmem>>, vector<2x1xf32>
    tpu.vector_store %arg11[%c0_27, %c0_28], %33 {strides = array<i32>} : memref<2x1xf32, #tpu.memory_space<vmem>>, vector<2x1xf32>,
    return
  }
  func.func @transform_0(%arg0: i32) -> (i32, i32) {
    %c0_i32 = arith.constant 0 : i32
    %c0_i32_0 = arith.constant 0 : i32
    return %arg0, %c0_i32 : i32, i32
  }
  func.func @transform_1(%arg0: i32) -> (i32, i32) {
    %c0_i32 = arith.constant 0 : i32
    %c0_i32_0 = arith.constant 0 : i32
    return %arg0, %c0_i32 : i32, i32
  }
  func.func @transform_2(%arg0: i32) -> (i32, i32) {
    %c0_i32 = arith.constant 0 : i32
    %c0_i32_0 = arith.constant 0 : i32
    %c0_i32_1 = arith.constant 0 : i32
    return %c0_i32, %c0_i32_0 : i32, i32
  }
  func.func @transform_3(%arg0: i32) -> (i32, i32) {
    %c0_i32 = arith.constant 0 : i32
    %c0_i32_0 = arith.constant 0 : i32
    %c0_i32_1 = arith.constant 0 : i32
    return %c0_i32, %c0_i32_0 : i32, i32
  }
  func.func @transform_4(%arg0: i32) -> (i32, i32) {
    %c0_i32 = arith.constant 0 : i32
    %c0_i32_0 = arith.constant 0 : i32
    %c0_i32_1 = arith.constant 0 : i32
    return %c0_i32, %c0_i32_0 : i32, i32
  }
  func.func @transform_5(%arg0: i32) -> (i32, i32) {
    %c0_i32 = arith.constant 0 : i32
    %c0_i32_0 = arith.constant 0 : i32
    %c0_i32_1 = arith.constant 0 : i32
    return %c0_i32, %c0_i32_0 : i32, i32
  }
  func.func @transform_6(%arg0: i32) -> (i32, i32) {
    %c0_i32 = arith.constant 0 : i32
    %c0_i32_0 = arith.constant 0 : i32
    %c0_i32_1 = arith.constant 0 : i32
    return %c0_i32, %c0_i32_0 : i32, i32
  }
  func.func @transform_7(%arg0: i32) -> (i32, i32) {
    %c0_i32 = arith.constant 0 : i32
    %c0_i32_0 = arith.constant 0 : i32
    %c0_i32_1 = arith.constant 0 : i32
    return %c0_i32, %c0_i32_0 : i32, i32
  }
  func.func @transform_8(%arg0: i32) -> (i32, i32) {
    %c0_i32 = arith.constant 0 : i32
    %c0_i32_0 = arith.constant 0 : i32
    %c0_i32_1 = arith.constant 0 : i32
    return %c0_i32, %c0_i32_0 : i32, i32
  }
  func.func @transform_9(%arg0: i32) -> (i32, i32) {
    %c0_i32 = arith.constant 0 : i32
    %c0_i32_0 = arith.constant 0 : i32
    %c0_i32_1 = arith.constant 0 : i32
    return %c0_i32, %c0_i32_0 : i32, i32
  }
  func.func @transform_10(%arg0: i32) -> (i32, i32) {
    %c0_i32 = arith.constant 0 : i32
    %c0_i32_0 = arith.constant 0 : i32
    return %arg0, %c0_i32 : i32, i32
  }
}

</mosaic_0001>

<llo_original>
// kernel: tpu_custom_call.1
$region0: #{tpu_custom_call.1}
  #allocation0 [shape = 'u32[]', space=smem, size = 0x4, offset = 0x4, fixed_abs, tag = 'smem constant byte address 0x4 - core index']
  #allocation1 [shape = 'u32[144,128]{1,0:T(1,128)}', space=vmem, size = 0x12000, scoped, tag = 'internal scratch']
  #allocation2 [shape = 'f32[1,1]{1,0:T(1,128)S(1)}', space=vmem, size = 0x200, scoped, tag = 'scoped memory for tpu_custom_call.1']
  #allocation3 [shape = 'f32[1,1]{1,0:T(1,128)S(1)}', space=vmem, size = 0x200, scoped, tag = 'scoped memory for tpu_custom_call.1']
  %s0 = inlined_call_operand.vmem [shape: f32[2,16], index: 0, kind: input, shape index: {}]
  %s1 = inlined_call_operand.vmem [shape: f32[2,8], index: 1, kind: input, shape index: {}]
  %s2 = inlined_call_operand.vmem [shape: f32[16,32], index: 2, kind: input, shape index: {}]
  %s3 = inlined_call_operand.vmem [shape: f32[32,1], index: 3, kind: input, shape index: {}]
  %s4 = inlined_call_operand.vmem [shape: f32[1,32], index: 4, kind: input, shape index: {}]
  %s5 = inlined_call_operand.<no memory space> [shape: f32[1,1], index: 5, kind: input, shape index: {}]
  %s6 = inlined_call_operand.vmem [shape: f32[8,32], index: 6, kind: input, shape index: {}]
  %s7 = inlined_call_operand.vmem [shape: f32[32,1], index: 7, kind: input, shape index: {}]
  %s8 = inlined_call_operand.vmem [shape: f32[1,32], index: 8, kind: input, shape index: {}]
  %s9 = inlined_call_operand.<no memory space> [shape: f32[1,1], index: 9, kind: input, shape index: {}]
  %s10 = inlined_call_operand.vmem [shape: f32[2,1], index: 10, kind: output, shape index: {}]
  %s11 = sld [smem:[#allocation0]]
  $region50: #{tpu_custom_call.1} parent=0
    _
  %s13 = ssub.s32 1, %s11
  %s14 = scalar_select 0, %s13, %s11
  %v15 = vstv %s5
  %16 = vst [vmem:[#allocation2] sm:$0x1] %v15
  %v17 = vstv %s9
  %18 = vst [vmem:[#allocation3] sm:$0x1] %v17
  // Predicated region
  $region2: #{tpu_custom_call.1} parent=0 // pred_check
    _
  $region3: #{tpu_custom_call.1} parent=0 // pred_check_branch
    %20 = sbr.rel (0) target = $region5
  $region4: #{tpu_custom_call.1} parent=0 // pred_region
    _
  $region5: #{tpu_custom_call.1} parent=0 // pred_fallthru
    _
  // Predicated region
  $region6: #{tpu_custom_call.1} parent=0 // pred_check
    _
  $region7: #{tpu_custom_call.1} parent=0 // pred_check_branch
    %22 = sbr.rel (0) target = $region9
  $region8: #{tpu_custom_call.1} parent=0 // pred_region
    _
  $region9: #{tpu_custom_call.1} parent=0 // pred_fallthru
    _
  // Predicated region
  $region10: #{tpu_custom_call.1} parent=0 // pred_check
    _
  $region11: #{tpu_custom_call.1} parent=0 // pred_check_branch
    %24 = sbr.rel (0) target = $region13
  $region12: #{tpu_custom_call.1} parent=0 // pred_region
    _
  $region13: #{tpu_custom_call.1} parent=0 // pred_fallthru
    _
  // Predicated region
  $region14: #{tpu_custom_call.1} parent=0 // pred_check
    _
  $region15: #{tpu_custom_call.1} parent=0 // pred_check_branch
    %26 = sbr.rel (0) target = $region17
  $region16: #{tpu_custom_call.1} parent=0 // pred_region
    _
  $region17: #{tpu_custom_call.1} parent=0 // pred_fallthru
    _
  // Predicated region
  $region18: #{tpu_custom_call.1} parent=0 // pred_check
    _
  $region19: #{tpu_custom_call.1} parent=0 // pred_check_branch
    %28 = sbr.rel (0) target = $region21
  $region20: #{tpu_custom_call.1} parent=0 // pred_region
    _
  $region21: #{tpu_custom_call.1} parent=0 // pred_fallthru
    _
  // Predicated region
  $region22: #{tpu_custom_call.1} parent=0 // pred_check
    _
  $region23: #{tpu_custom_call.1} parent=0 // pred_check_branch
    %30 = sbr.rel (0) target = $region25
  $region24: #{tpu_custom_call.1} parent=0 // pred_region
    _
  $region25: #{tpu_custom_call.1} parent=0 // pred_fallthru
    _
  // Predicated region
  $region26: #{tpu_custom_call.1} parent=0 // pred_check
    _
  $region27: #{tpu_custom_call.1} parent=0 // pred_check_branch
    %32 = sbr.rel (0) target = $region29
  $region28: #{tpu_custom_call.1} parent=0 // pred_region
    _
  $region29: #{tpu_custom_call.1} parent=0 // pred_fallthru
    _
  // Predicated region
  $region30: #{tpu_custom_call.1} parent=0 // pred_check
    _
  $region31: #{tpu_custom_call.1} parent=0 // pred_check_branch
    %34 = sbr.rel (0) target = $region33
  $region32: #{tpu_custom_call.1} parent=0 // pred_region
    _
  $region33: #{tpu_custom_call.1} parent=0 // pred_fallthru
    _
  // Predicated region
  $region34: #{tpu_custom_call.1} parent=0 // pred_check
    _
  $region35: #{tpu_custom_call.1} parent=0 // pred_check_branch
    %36 = sbr.rel (0) target = $region37
  $region36: #{tpu_custom_call.1} parent=0 // pred_region
    _
  $region37: #{tpu_custom_call.1} parent=0 // pred_fallthru
    _
  // Predicated region
  $region38: #{tpu_custom_call.1} parent=0 // pred_check
    _
  $region39: #{tpu_custom_call.1} parent=0 // pred_check_branch
    %38 = sbr.rel (0) target = $region41
  $region40: #{tpu_custom_call.1} parent=0 // pred_region
    _
  $region41: #{tpu_custom_call.1} parent=0 // pred_fallthru
    _
  %v39 = vld [vmem:[%s0] sm:$0x3]
  %v40 = vld [vmem:[%s2] sm:$0xff]
  %v41 = vld [vmem:[%s2 + $0x8] sm:$0xff]
  %v42 = vld [vmem:[%s4] sm:$0x1]
  %v44 = vlaneseq
  %v45 = vshrl.u32 %v44, 7
  %v46 = vsub.s32 0, %v45
  %v47 = vrot.slane %v42, %v46
  %vm49 = vcmask 130048
  %v51 = vsel %vm49, %v39, 0
  %53 = vmatprep.subr.mxu0 0.0
  %54 = vmatpush1.msra.mxu0 0.0
  %55 = vmatprep.subr.mxu0 0.0
  %56 = vmatpush1.msra.mxu0 0.0
  %57 = vmatprep.subr.mxu0 0.0
  %58 = vmatpush1.msra.mxu0 0.0
  %59 = vmatprep.subr.mxu0 0.0
  %60 = vmatpush1.msra.mxu0 0.0
  %61 = vmatprep.subr.mxu0 0.0
  %62 = vmatpush1.msra.mxu0 0.0
  %63 = vmatprep.subr.mxu0 0.0
  %64 = vmatpush1.msra.mxu0 0.0
  %65 = vmatprep.subr.mxu0 0.0
  %66 = vmatpush1.msra.mxu0 0.0
  %67 = vmatprep.subr.mxu0 0.0
  %68 = vmatpush1.msra.mxu0 0.0
  %69 = vmatprep.subr.mxu0 0.0
  %70 = vmatpush1.msra.mxu0 0.0
  %71 = vmatprep.subr.mxu0 0.0
  %72 = vmatpush1.msra.mxu0 0.0
  %73 = vmatprep.subr.mxu0 0.0
  %74 = vmatpush1.msra.mxu0 0.0
  %75 = vmatprep.subr.mxu0 0.0
  %76 = vmatpush1.msra.mxu0 0.0
  %77 = vmatprep.subr.mxu0 0.0
  %78 = vmatpush1.msra.mxu0 0.0
  %79 = vmatprep.subr.mxu0 0.0
  %80 = vmatpush1.msra.mxu0 0.0
  %81 = vmatprep.subr.mxu0 0.0
  %82 = vmatpush1.msra.mxu0 %v41
  %83 = vmatprep.subr.mxu0 0.0
  %84 = vmatpush1.msra.mxu0 %v40
  %85 = vmatprep.subr.mxu0 0.0
  %86 = vmatpush2.msra.mxu0 0.0
  %87 = vmatprep.subr.mxu0 0.0
  %88 = vmatpush2.msra.mxu0 0.0
  %89 = vmatprep.subr.mxu0 0.0
  %90 = vmatpush2.msra.mxu0 0.0
  %91 = vmatprep.subr.mxu0 0.0
  %92 = vmatpush2.msra.mxu0 0.0
  %93 = vmatprep.subr.mxu0 0.0
  %94 = vmatpush2.msra.mxu0 0.0
  %95 = vmatprep.subr.mxu0 0.0
  %96 = vmatpush2.msra.mxu0 0.0
  %97 = vmatprep.subr.mxu0 0.0
  %98 = vmatpush2.msra.mxu0 0.0
  %99 = vmatprep.subr.mxu0 0.0
  %100 = vmatpush2.msra.mxu0 0.0
  %101 = vmatprep.subr.mxu0 0.0
  %102 = vmatpush2.msra.mxu0 0.0
  %103 = vmatprep.subr.mxu0 0.0
  %104 = vmatpush2.msra.mxu0 0.0
  %105 = vmatprep.subr.mxu0 0.0
  %106 = vmatpush2.msra.mxu0 0.0
  %107 = vmatprep.subr.mxu0 0.0
  %108 = vmatpush2.msra.mxu0 0.0
  %109 = vmatprep.subr.mxu0 0.0
  %110 = vmatpush2.msra.mxu0 0.0
  %111 = vmatprep.subr.mxu0 0.0
  %112 = vmatpush2.msra.mxu0 0.0
  %113 = vmatprep.subr.mxu0 0.0
  %114 = vmatpush2.msra.mxu0 0.0
  %115 = vmatprep.subr.mxu0 0.0
  %116 = vmatpush2.msra.mxu0 0.0
  %117 = vmatprep.mubr.f32.mxu0 0.0
  %118 = vmatmul.mubr.f32.gmra.mxu0 %v51
  %v119 = vpop.f32.mrf.mxu0
  %v120 = vadd.f32 %v47, %v119
  %v121 = vpop.f32.mrf.mxu0
  %122 = vdwg.mxu0
  %v123 = vmax.f32 %v120, 0.0
  %v124 = vld [vmem:[%s3] sm:$0xff]
  %v125 = vld [vmem:[%s3 + $0x8] sm:$0xff]
  %v126 = vld [vmem:[%s3 + $0x10] sm:$0xff]
  %v127 = vld [vmem:[%s3 + $0x18] sm:$0xff]
  %v128 = vld [vmem:[#allocation2] sm:$0x1]
  %v130 = vlaneseq
  %v131 = vshrl.u32 %v130, 7
  %v132 = vsub.s32 0, %v131
  %v133 = vrot.slane %v128, %v132
  %vm135 = vcmask 261120
  %v137 = vsel %vm135, %v123, 0
  %139 = vmatprep.subr.mxu0 0.0
  %140 = vmatpush1.msra.mxu0 0.0
  %141 = vmatprep.subr.mxu0 0.0
  %142 = vmatpush1.msra.mxu0 0.0
  %143 = vmatprep.subr.mxu0 0.0
  %144 = vmatpush1.msra.mxu0 0.0
  %145 = vmatprep.subr.mxu0 0.0
  %146 = vmatpush1.msra.mxu0 0.0
  %147 = vmatprep.subr.mxu0 0.0
  %148 = vmatpush1.msra.mxu0 0.0
  %149 = vmatprep.subr.mxu0 0.0
  %150 = vmatpush1.msra.mxu0 0.0
  %151 = vmatprep.subr.mxu0 0.0
  %152 = vmatpush1.msra.mxu0 0.0
  %153 = vmatprep.subr.mxu0 0.0
  %154 = vmatpush1.msra.mxu0 0.0
  %155 = vmatprep.subr.mxu0 0.0
  %156 = vmatpush1.msra.mxu0 0.0
  %157 = vmatprep.subr.mxu0 0.0
  %158 = vmatpush1.msra.mxu0 0.0
  %159 = vmatprep.subr.mxu0 0.0
  %160 = vmatpush1.msra.mxu0 0.0
  %161 = vmatprep.subr.mxu0 0.0
  %162 = vmatpush1.msra.mxu0 0.0
  %163 = vmatprep.subr.mxu0 0.0
  %164 = vmatpush1.msra.mxu0 %v127
  %165 = vmatprep.subr.mxu0 0.0
  %166 = vmatpush1.msra.mxu0 %v126
  %167 = vmatprep.subr.mxu0 0.0
  %168 = vmatpush1.msra.mxu0 %v125
  %169 = vmatprep.subr.mxu0 0.0
  %170 = vmatpush1.msra.mxu0 %v124
  %171 = vmatprep.subr.mxu0 0.0
  %172 = vmatpush2.msra.mxu0 0.0
  %173 = vmatprep.subr.mxu0 0.0
  %174 = vmatpush2.msra.mxu0 0.0
  %175 = vmatprep.subr.mxu0 0.0
  %176 = vmatpush2.msra.mxu0 0.0
  %177 = vmatprep.subr.mxu0 0.0
  %178 = vmatpush2.msra.mxu0 0.0
  %179 = vmatprep.subr.mxu0 0.0
  %180 = vmatpush2.msra.mxu0 0.0
  %181 = vmatprep.subr.mxu0 0.0
  %182 = vmatpush2.msra.mxu0 0.0
  %183 = vmatprep.subr.mxu0 0.0
  %184 = vmatpush2.msra.mxu0 0.0
  %185 = vmatprep.subr.mxu0 0.0
  %186 = vmatpush2.msra.mxu0 0.0
  %187 = vmatprep.subr.mxu0 0.0
  %188 = vmatpush2.msra.mxu0 0.0
  %189 = vmatprep.subr.mxu0 0.0
  %190 = vmatpush2.msra.mxu0 0.0
  %191 = vmatprep.subr.mxu0 0.0
  %192 = vmatpush2.msra.mxu0 0.0
  %193 = vmatprep.subr.mxu0 0.0
  %194 = vmatpush2.msra.mxu0 0.0
  %195 = vmatprep.subr.mxu0 0.0
  %196 = vmatpush2.msra.mxu0 0.0
  %197 = vmatprep.subr.mxu0 0.0
  %198 = vmatpush2.msra.mxu0 0.0
  %199 = vmatprep.subr.mxu0 0.0
  %200 = vmatpush2.msra.mxu0 0.0
  %201 = vmatprep.subr.mxu0 0.0
  %202 = vmatpush2.msra.mxu0 0.0
  %203 = vmatprep.mubr.f32.mxu0 0.0
  %204 = vmatmul.mubr.f32.gmra.mxu0 %v137
  %v205 = vpop.f32.mrf.mxu0
  %v206 = vadd.f32 %v133, %v205
  %v207 = vpop.f32.mrf.mxu0
  %208 = vdwg.mxu0
  %v209 = vld [vmem:[%s1] sm:$0x3]
  %v210 = vld [vmem:[%s6] sm:$0xff]
  %v211 = vld [vmem:[%s8] sm:$0x1]
  %v213 = vlaneseq
  %v214 = vshrl.u32 %v213, 7
  %v215 = vsub.s32 0, %v214
  %v216 = vrot.slane %v211, %v215
  %vm218 = vcmask 64512
  %v220 = vsel %vm218, %v209, 0
  %222 = vmatprep.subr.mxu0 0.0
  %223 = vmatpush1.msra.mxu0 0.0
  %224 = vmatprep.subr.mxu0 0.0
  %225 = vmatpush1.msra.mxu0 0.0
  %226 = vmatprep.subr.mxu0 0.0
  %227 = vmatpush1.msra.mxu0 0.0
  %228 = vmatprep.subr.mxu0 0.0
  %229 = vmatpush1.msra.mxu0 0.0
  %230 = vmatprep.subr.mxu0 0.0
  %231 = vmatpush1.msra.mxu0 0.0
  %232 = vmatprep.subr.mxu0 0.0
  %233 = vmatpush1.msra.mxu0 0.0
  %234 = vmatprep.subr.mxu0 0.0
  %235 = vmatpush1.msra.mxu0 0.0
  %236 = vmatprep.subr.mxu0 0.0
  %237 = vmatpush1.msra.mxu0 0.0
  %238 = vmatprep.subr.mxu0 0.0
  %239 = vmatpush1.msra.mxu0 0.0
  %240 = vmatprep.subr.mxu0 0.0
  %241 = vmatpush1.msra.mxu0 0.0
  %242 = vmatprep.subr.mxu0 0.0
  %243 = vmatpush1.msra.mxu0 0.0
  %244 = vmatprep.subr.mxu0 0.0
  %245 = vmatpush1.msra.mxu0 0.0
  %246 = vmatprep.subr.mxu0 0.0
  %247 = vmatpush1.msra.mxu0 0.0
  %248 = vmatprep.subr.mxu0 0.0
  %249 = vmatpush1.msra.mxu0 0.0
  %250 = vmatprep.subr.mxu0 0.0
  %251 = vmatpush1.msra.mxu0 0.0
  %252 = vmatprep.subr.mxu0 0.0
  %253 = vmatpush1.msra.mxu0 %v210
  %254 = vmatprep.subr.mxu0 0.0
  %255 = vmatpush2.msra.mxu0 0.0
  %256 = vmatprep.subr.mxu0 0.0
  %257 = vmatpush2.msra.mxu0 0.0
  %258 = vmatprep.subr.mxu0 0.0
  %259 = vmatpush2.msra.mxu0 0.0
  %260 = vmatprep.subr.mxu0 0.0
  %261 = vmatpush2.msra.mxu0 0.0
  %262 = vmatprep.subr.mxu0 0.0
  %263 = vmatpush2.msra.mxu0 0.0
  %264 = vmatprep.subr.mxu0 0.0
  %265 = vmatpush2.msra.mxu0 0.0
  %266 = vmatprep.subr.mxu0 0.0
  %267 = vmatpush2.msra.mxu0 0.0
  %268 = vmatprep.subr.mxu0 0.0
  %269 = vmatpush2.msra.mxu0 0.0
  %270 = vmatprep.subr.mxu0 0.0
  %271 = vmatpush2.msra.mxu0 0.0
  %272 = vmatprep.subr.mxu0 0.0
  %273 = vmatpush2.msra.mxu0 0.0
  %274 = vmatprep.subr.mxu0 0.0
  %275 = vmatpush2.msra.mxu0 0.0
  %276 = vmatprep.subr.mxu0 0.0
  %277 = vmatpush2.msra.mxu0 0.0
  %278 = vmatprep.subr.mxu0 0.0
  %279 = vmatpush2.msra.mxu0 0.0
  %280 = vmatprep.subr.mxu0 0.0
  %281 = vmatpush2.msra.mxu0 0.0
  %282 = vmatprep.subr.mxu0 0.0
  %283 = vmatpush2.msra.mxu0 0.0
  %284 = vmatprep.subr.mxu0 0.0
  %285 = vmatpush2.msra.mxu0 0.0
  %286 = vmatprep.mubr.f32.mxu0 0.0
  %287 = vmatmul.mubr.f32.gmra.mxu0 %v220
  %v288 = vpop.f32.mrf.mxu0
  %v289 = vadd.f32 %v216, %v288
  %v290 = vpop.f32.mrf.mxu0
  %291 = vdwg.mxu0
  %v292 = vmax.f32 %v289, 0.0
  %v293 = vld [vmem:[%s7] sm:$0xff]
  %v294 = vld [vmem:[%s7 + $0x8] sm:$0xff]
  %v295 = vld [vmem:[%s7 + $0x10] sm:$0xff]
  %v296 = vld [vmem:[%s7 + $0x18] sm:$0xff]
  %v297 = vld [vmem:[#allocation3] sm:$0x1]
  %v299 = vlaneseq
  %v300 = vshrl.u32 %v299, 7
  %v301 = vsub.s32 0, %v300
  %v302 = vrot.slane %v297, %v301
  %v305 = vsel %vm135, %v292, 0
  %307 = vmatprep.subr.mxu0 0.0
  %308 = vmatpush1.msra.mxu0 0.0
  %309 = vmatprep.subr.mxu0 0.0
  %310 = vmatpush1.msra.mxu0 0.0
  %311 = vmatprep.subr.mxu0 0.0
  %312 = vmatpush1.msra.mxu0 0.0
  %313 = vmatprep.subr.mxu0 0.0
  %314 = vmatpush1.msra.mxu0 0.0
  %315 = vmatprep.subr.mxu0 0.0
  %316 = vmatpush1.msra.mxu0 0.0
  %317 = vmatprep.subr.mxu0 0.0
  %318 = vmatpush1.msra.mxu0 0.0
  %319 = vmatprep.subr.mxu0 0.0
  %320 = vmatpush1.msra.mxu0 0.0
  %321 = vmatprep.subr.mxu0 0.0
  %322 = vmatpush1.msra.mxu0 0.0
  %323 = vmatprep.subr.mxu0 0.0
  %324 = vmatpush1.msra.mxu0 0.0
  %325 = vmatprep.subr.mxu0 0.0
  %326 = vmatpush1.msra.mxu0 0.0
  %327 = vmatprep.subr.mxu0 0.0
  %328 = vmatpush1.msra.mxu0 0.0
  %329 = vmatprep.subr.mxu0 0.0
  %330 = vmatpush1.msra.mxu0 0.0
  %331 = vmatprep.subr.mxu0 0.0
  %332 = vmatpush1.msra.mxu0 %v296
  %333 = vmatprep.subr.mxu0 0.0
  %334 = vmatpush1.msra.mxu0 %v295
  %335 = vmatprep.subr.mxu0 0.0
  %336 = vmatpush1.msra.mxu0 %v294
  %337 = vmatprep.subr.mxu0 0.0
  %338 = vmatpush1.msra.mxu0 %v293
  %339 = vmatprep.subr.mxu0 0.0
  %340 = vmatpush2.msra.mxu0 0.0
  %341 = vmatprep.subr.mxu0 0.0
  %342 = vmatpush2.msra.mxu0 0.0
  %343 = vmatprep.subr.mxu0 0.0
  %344 = vmatpush2.msra.mxu0 0.0
  %345 = vmatprep.subr.mxu0 0.0
  %346 = vmatpush2.msra.mxu0 0.0
  %347 = vmatprep.subr.mxu0 0.0
  %348 = vmatpush2.msra.mxu0 0.0
  %349 = vmatprep.subr.mxu0 0.0
  %350 = vmatpush2.msra.mxu0 0.0
  %351 = vmatprep.subr.mxu0 0.0
  %352 = vmatpush2.msra.mxu0 0.0
  %353 = vmatprep.subr.mxu0 0.0
  %354 = vmatpush2.msra.mxu0 0.0
  %355 = vmatprep.subr.mxu0 0.0
  %356 = vmatpush2.msra.mxu0 0.0
  %357 = vmatprep.subr.mxu0 0.0
  %358 = vmatpush2.msra.mxu0 0.0
  %359 = vmatprep.subr.mxu0 0.0
  %360 = vmatpush2.msra.mxu0 0.0
  %361 = vmatprep.subr.mxu0 0.0
  %362 = vmatpush2.msra.mxu0 0.0
  %363 = vmatprep.subr.mxu0 0.0
  %364 = vmatpush2.msra.mxu0 0.0
  %365 = vmatprep.subr.mxu0 0.0
  %366 = vmatpush2.msra.mxu0 0.0
  %367 = vmatprep.subr.mxu0 0.0
  %368 = vmatpush2.msra.mxu0 0.0
  %369 = vmatprep.subr.mxu0 0.0
  %370 = vmatpush2.msra.mxu0 0.0
  %371 = vmatprep.mubr.f32.mxu0 0.0
  %372 = vmatmul.mubr.f32.gmra.mxu0 %v305
  %v373 = vpop.f32.mrf.mxu0
  %v374 = vadd.f32 %v302, %v373
  %v375 = vpop.f32.mrf.mxu0
  %376 = vdwg.mxu0
  %v377 = vadd.f32 %v206, %v374
  %v378 = vsub.f32 0.0, %v377
  %v379 = vmul.f32 %v378, 1.442695
  %v380 = vpow.pop %v379
  %v381 = vadd.f32 %v380, 1.0
  %v382 = vrcp.pop %v381
  %v383 = vmul.f32 1.0, %v382
  %vm384 = vcmask 1024
  %385 = vst.msk [vmem:[%s10] sm:$0x3] %vm384, %v383
  // Predicated region
  $region42: #{tpu_custom_call.1} parent=0 // pred_check
    _
  $region43: #{tpu_custom_call.1} parent=0 // pred_check_branch
    %387 = sbr.rel (0) target = $region45
  $region44: #{tpu_custom_call.1} parent=0 // pred_region
    _
  $region45: #{tpu_custom_call.1} parent=0 // pred_fallthru
    _
  // Predicated region
  $region46: #{tpu_custom_call.1} parent=0 // pred_check
    _
  $region47: #{tpu_custom_call.1} parent=0 // pred_check_branch
    %389 = sbr.rel (0) target = $region49
  $region48: #{tpu_custom_call.1} parent=0 // pred_region
    _
  $region49: #{tpu_custom_call.1} parent=0 // pred_fallthru
    _

</llo_original>
